<compile_context>
chip_gen: v5e
topology: v5e:2x2
jax: 0.10.0
libtpu: 0.0.40
codegen_flags: <defaults>
</compile_context>

<pallas_src>
import functools
import math

import jax
import jax.numpy as jnp
from jax.experimental import pallas as pl
from jax.experimental.pallas import tpu as pltpu


def _round_up(n, m):
    return ((n + m - 1) // m) * m


# ---------------------------------------------------------------------------
# Packed parameter slab layout (all row starts 8-aligned => cheap sublane
# slices, no relayouts).  Includes precomputed Normal-distribution constants.
# ---------------------------------------------------------------------------
def make_param_layout(obs_dim, hidden_sizes, action_dim):
    h1, h2 = hidden_sizes
    width = max(h1, h2, action_dim)
    r_w1 = 0
    r_b1 = r_w1 + _round_up(obs_dim, 8)
    r_w2 = r_b1 + 8
    r_b2 = r_w2 + _round_up(h1, 8)
    r_w3 = r_b2 + 8
    r_b3 = r_w3 + _round_up(h2, 8)
    r_std = r_b3 + 8      # exp(log_std)
    r_itv = r_std + 8     # 0.5 * exp(-2 * log_std)  == 1 / (2 sigma^2)
    r_ln = r_itv + 8      # log_std + 0.5 * log(2 pi)
    rows = r_ln + 8
    return dict(obs=obs_dim, h1=h1, h2=h2, act=action_dim, width=width,
                r_w1=r_w1, r_b1=r_b1, r_w2=r_w2, r_b2=r_b2,
                r_w3=r_w3, r_b3=r_b3, r_std=r_std, r_itv=r_itv, r_ln=r_ln,
                rows=rows)


def pack_params(params, layout):
    """Pack all weights/biases + precomputed Normal constants into one slab."""
    L = layout
    log_std = params["log_std"].reshape(-1)
    std = jnp.exp(log_std)
    inv_two_var = 0.5 * jnp.exp(-2.0 * log_std)
    log_norm = log_std + 0.5 * math.log(2.0 * math.pi)

    slab = jnp.zeros((L["rows"], L["width"]), jnp.float32)
    slab = slab.at[L["r_w1"]:L["r_w1"] + L["obs"], :L["h1"]].set(params["w1"])
    slab = slab.at[L["r_b1"], :L["h1"]].set(params["b1"].reshape(-1))
    slab = slab.at[L["r_w2"]:L["r_w2"] + L["h1"], :L["h2"]].set(params["w2"])
    slab = slab.at[L["r_b2"], :L["h2"]].set(params["b2"].reshape(-1))
    slab = slab.at[L["r_w3"]:L["r_w3"] + L["h2"], :L["act"]].set(params["w3"])
    slab = slab.at[L["r_b3"], :L["act"]].set(params["b3"].reshape(-1))
    slab = slab.at[L["r_std"], :L["act"]].set(std)
    slab = slab.at[L["r_itv"], :L["act"]].set(inv_two_var)
    slab = slab.at[L["r_ln"], :L["act"]].set(log_norm)
    return slab


# ---------------------------------------------------------------------------
# Kernel: one batch tile per grid step.
#   x_ref      : (TILE_B, obs)
#   noise_ref  : (TILE_B, A)    standard-normal noise (reparameterized sample)
#   act_ref    : (TILE_B, A)    action_taken
#   params_ref : (rows, width)  packed parameter slab (VMEM-resident)
#   out_ref    : (TILE_B, A+2)  = [pi | logp | logp_pi]
# ---------------------------------------------------------------------------
def gaussian_policy_kernel(x_ref, noise_ref, act_ref, params_ref, out_ref,
                           *, layout):
    L = layout
    obs, h1, h2, A = L["obs"], L["h1"], L["h2"], L["act"]

    x = x_ref[...]
    noise = noise_ref[...]
    action = act_ref[...]

    w1 = params_ref[L["r_w1"]:L["r_w1"] + obs, :h1]
    b1 = params_ref[L["r_b1"]:L["r_b1"] + 1, :h1]
    w2 = params_ref[L["r_w2"]:L["r_w2"] + h1, :h2]
    b2 = params_ref[L["r_b2"]:L["r_b2"] + 1, :h2]
    w3 = params_ref[L["r_w3"]:L["r_w3"] + h2, :A]
    b3 = params_ref[L["r_b3"]:L["r_b3"] + 1, :A]
    std = params_ref[L["r_std"]:L["r_std"] + 1, :A]
    inv_two_var = params_ref[L["r_itv"]:L["r_itv"] + 1, :A]
    log_norm = params_ref[L["r_ln"]:L["r_ln"] + 1, :A]

    # --- MLP mu(x): tanh hidden layers, identity output activation ---
    h = jnp.tanh(jnp.dot(x, w1, preferred_element_type=jnp.float32) + b1)
    h = jnp.tanh(jnp.dot(h, w2, preferred_element_type=jnp.float32) + b2)
    mu = jnp.dot(h, w3, preferred_element_type=jnp.float32) + b3

    # pi = Normal(mu, std).sample()   (reparameterized with external noise)
    pi = mu + std * noise

    # logp_pi = log_prob(pi).sum(1); (pi - mu) == std*noise analytically.
    logp_pi = jnp.sum(-0.5 * noise * noise - log_norm, axis=1, keepdims=True)

    # logp = log_prob(action_taken).sum(1)
    d = action - mu
    logp = jnp.sum(-(d * d) * inv_two_var - log_norm, axis=1, keepdims=True)

    # Direct sub-slice stores (no lane-axis concatenate/shuffle).
    out_ref[:, :A] = pi
    out_ref[:, A:A + 1] = logp
    out_ref[:, A + 1:A + 2] = logp_pi


# ---------------------------------------------------------------------------
# Tile-size choice: biggest multiple of 8 that divides the 8-padded batch and
# is <= tile_b_max; for large batches keep >=2 grid steps (v7x: 2 TensorCores).
# ---------------------------------------------------------------------------
def _pick_tile_b(b_pad8, tile_b_max=8192):
    cap = tile_b_max
    if b_pad8 >= 4096:
        cap = min(cap, b_pad8 // 2)
    t = min(cap, b_pad8)
    t = max((t // 8) * 8, 8)
    while t > 8 and b_pad8 % t != 0:
        t -= 8
    return t


# ---------------------------------------------------------------------------
# Wrapper
# ---------------------------------------------------------------------------
def gaussian_policy_forward(x, noise, action_taken, param_slab, layout,
                            *, tile_b_max=8192):
    B = x.shape[0]
    obs, A = layout["obs"], layout["act"]

    b8 = _round_up(B, 8)
    tile_b = _pick_tile_b(b8, tile_b_max)

    if b8 != B:  # pad at most 7 ragged rows; no pad at all when B % 8 == 0
        pad = ((0, b8 - B), (0, 0))
        x = jnp.pad(x, pad)
        noise = jnp.pad(noise, pad)
        action_taken = jnp.pad(action_taken, pad)

    grid = (b8 // tile_b,)
    kernel = functools.partial(gaussian_policy_kernel, layout=layout)

    out = pl.pallas_call(
        kernel,
        out_shape=jax.ShapeDtypeStruct((b8, A + 2), jnp.float32),
        grid=grid,
        in_specs=[
            pl.BlockSpec((tile_b, obs), lambda i: (i, 0)),
            pl.BlockSpec((tile_b, A), lambda i: (i, 0)),
            pl.BlockSpec((tile_b, A), lambda i: (i, 0)),
            # Parameter slab: same block every step -> stays VMEM-resident.
            pl.BlockSpec((layout["rows"], layout["width"]), lambda i: (0, 0)),
        ],
        out_specs=pl.BlockSpec((tile_b, A + 2), lambda i: (i, 0)),
        compiler_params=pltpu.CompilerParams(
            dimension_semantics=("parallel",)),
    )(x, noise, action_taken, param_slab)

    pi = out[:B, :A]
    logp = out[:B, A]
    logp_pi = out[:B, A + 1]
    return pi, logp, logp_pi


# ---------------------------------------------------------------------------
# Init + pure-JAX reference (torch semantics)
# ---------------------------------------------------------------------------
def init_params(key, obs_dim, hidden_sizes, action_dim):
    sizes = [obs_dim] + list(hidden_sizes) + [action_dim]
    keys = jax.random.split(key, len(sizes) - 1)
    params = {}
    for i, (fan_in, fan_out) in enumerate(zip(sizes[:-1], sizes[1:]), start=1):
        bound = 1.0 / jnp.sqrt(fan_in)
        params[f"w{i}"] = jax.random.uniform(
            keys[i - 1], (fan_in, fan_out), jnp.float32, -bound, bound)
        params[f"b{i}"] = jnp.zeros((1, fan_out), jnp.float32)
    params["log_std"] = -0.5 * jnp.ones((1, action_dim), jnp.float32)
    return params


def reference_forward(x, params, action_taken, noise):
    h = jnp.tanh(x @ params["w1"] + params["b1"])
    h = jnp.tanh(h @ params["w2"] + params["b2"])
    mu = h @ params["w3"] + params["b3"]
    log_std = params["log_std"]
    std = jnp.exp(log_std)
    pi = mu + std * noise

    def log_prob(v):
        return (-((v - mu) ** 2) / (2.0 * std * std)
                - log_std - 0.5 * jnp.log(2.0 * jnp.pi))

    return (pi,
            jnp.sum(log_prob(action_taken), axis=1),
            jnp.sum(log_prob(pi), axis=1))


if __name__ == "__main__":
    # Small shapes consistent with the module: obs_dim=16, hidden=(32, 32), A=4.
    B, OBS, HIDDEN, A = 8, 16, (32, 32), 4

    key = jax.random.PRNGKey(0)
    k_param, k_x, k_act, k_noise = jax.random.split(key, 4)

    params = init_params(k_param, OBS, HIDDEN, A)
    layout = make_param_layout(OBS, HIDDEN, A)
    param_slab = pack_params(params, layout)

    x = jax.random.normal(k_x, (B, OBS), jnp.float32)
    action_taken = jax.random.normal(k_act, (B, A), jnp.float32)
    noise = jax.random.normal(k_noise, (B, A), jnp.float32)

    pi, logp, logp_pi = gaussian_policy_forward(
        x, noise, action_taken, param_slab, layout)
    jax.block_until_ready((pi, logp, logp_pi))

    pi_ref, logp_ref, logp_pi_ref = reference_forward(
        x, params, action_taken, noise)
    assert jnp.allclose(pi, pi_ref, atol=1e-5, rtol=1e-4)
    assert jnp.allclose(logp, logp_ref, atol=1e-5, rtol=1e-4)
    assert jnp.allclose(logp_pi, logp_pi_ref, atol=1e-5, rtol=1e-4)

    print("KERNEL_OK")
</pallas_src>

<mosaic_0001>
module attributes {stable_mosaic.version = 11 : i64} {
  func.func @gaussian_policy_kernel(%arg0: i32, %arg1: memref<8x16xf32, #tpu.memory_space<vmem>>, %arg2: memref<8x4xf32, #tpu.memory_space<vmem>>, %arg3: memref<8x4xf32, #tpu.memory_space<vmem>>, %arg4: memref<128x32xf32, #tpu.memory_space<vmem>>, %arg5: memref<8x6xf32, #tpu.memory_space<vmem>>) attributes {dimension_semantics = [#tpu.dimension_semantics<parallel>], iteration_bounds = array<i64: 1>, scalar_prefetch = 0 : i64, scratch_operands = 0 : i64, tpu.core_type = #tpu.core_type<tc>, window_params = [{transform_indices = @transform_0, window_bounds = array<i64: 8, 16>}, {transform_indices = @transform_1, window_bounds = array<i64: 8, 4>}, {transform_indices = @transform_2, window_bounds = array<i64: 8, 4>}, {pipeline_mode = #tpu.pipeline_mode<synchronous>, transform_indices = @transform_3, window_bounds = array<i64: 128, 32>}, {transform_indices = @transform_4, window_bounds = array<i64: 8, 6>}]} {
    %c0 = arith.constant 0 : index
    %c0_0 = arith.constant 0 : index
    %0 = vector.load %arg1[%c0, %c0_0] : memref<8x16xf32, #tpu.memory_space<vmem>>, vector<8x16xf32>
    %c0_1 = arith.constant 0 : index
    %c0_2 = arith.constant 0 : index
    %1 = vector.load %arg2[%c0_1, %c0_2] : memref<8x4xf32, #tpu.memory_space<vmem>>, vector<8x4xf32>
    %c0_3 = arith.constant 0 : index
    %c0_4 = arith.constant 0 : index
    %2 = vector.load %arg3[%c0_3, %c0_4] : memref<8x4xf32, #tpu.memory_space<vmem>>, vector<8x4xf32>
    %c0_5 = arith.constant 0 : index
    %c0_6 = arith.constant 0 : index
    %3 = vector.load %arg4[%c0_5, %c0_6] : memref<128x32xf32, #tpu.memory_space<vmem>>, vector<16x32xf32>
    %c16 = arith.constant 16 : index
    %c0_7 = arith.constant 0 : index
    %4 = vector.load %arg4[%c16, %c0_7] : memref<128x32xf32, #tpu.memory_space<vmem>>, vector<1x32xf32>
    %c24 = arith.constant 24 : index
    %c0_8 = arith.constant 0 : index
    %5 = vector.load %arg4[%c24, %c0_8] : memref<128x32xf32, #tpu.memory_space<vmem>>, vector<32x32xf32>
    %c56 = arith.constant 56 : index
    %c0_9 = arith.constant 0 : index
    %6 = vector.load %arg4[%c56, %c0_9] : memref<128x32xf32, #tpu.memory_space<vmem>>, vector<1x32xf32>
    %c64 = arith.constant 64 : index
    %c0_10 = arith.constant 0 : index
    %7 = vector.load %arg4[%c64, %c0_10] : memref<128x32xf32, #tpu.memory_space<vmem>>, vector<32x4xf32>
    %c96 = arith.constant 96 : index
    %c0_11 = arith.constant 0 : index
    %8 = vector.load %arg4[%c96, %c0_11] : memref<128x32xf32, #tpu.memory_space<vmem>>, vector<1x4xf32>
    %c104 = arith.constant 104 : index
    %c0_12 = arith.constant 0 : index
    %9 = vector.load %arg4[%c104, %c0_12] : memref<128x32xf32, #tpu.memory_space<vmem>>, vector<1x4xf32>
    %c112 = arith.constant 112 : index
    %c0_13 = arith.constant 0 : index
    %10 = vector.load %arg4[%c112, %c0_13] : memref<128x32xf32, #tpu.memory_space<vmem>>, vector<1x4xf32>
    %c120 = arith.constant 120 : index
    %c0_14 = arith.constant 0 : index
    %11 = vector.load %arg4[%c120, %c0_14] : memref<128x32xf32, #tpu.memory_space<vmem>>, vector<1x4xf32>
    %cst = arith.constant dense<0.000000e+00> : vector<8x32xf32>
    %12 = tpu.matmul %0, %3, %cst {dimension_numbers = #tpu.dot_dimension_numbers<[1], [0], [0], [1], [0, 0, 1, 1], [], []>} : vector<8x16xf32>, vector<16x32xf32>, vector<8x32xf32> -> vector<8x32xf32>
    %13 = vector.broadcast %4 : vector<1x32xf32> to vector<8x32xf32>
    %14 = arith.addf %12, %13 : vector<8x32xf32>
    %15 = math.tanh %14 : vector<8x32xf32>
    %cst_15 = arith.constant dense<0.000000e+00> : vector<8x32xf32>
    %16 = tpu.matmul %15, %5, %cst_15 {dimension_numbers = #tpu.dot_dimension_numbers<[1], [0], [0], [1], [0, 0, 1, 1], [], []>} : vector<8x32xf32>, vector<32x32xf32>, vector<8x32xf32> -> vector<8x32xf32>
    %17 = vector.broadcast %6 : vector<1x32xf32> to vector<8x32xf32>
    %18 = arith.addf %16, %17 : vector<8x32xf32>
    %19 = math.tanh %18 : vector<8x32xf32>
    %cst_16 = arith.constant dense<0.000000e+00> : vector<8x4xf32>
    %20 = tpu.matmul %19, %7, %cst_16 {dimension_numbers = #tpu.dot_dimension_numbers<[1], [0], [0], [1], [0, 0, 1, 1], [], []>} : vector<8x32xf32>, vector<32x4xf32>, vector<8x4xf32> -> vector<8x4xf32>
    %21 = vector.broadcast %8 : vector<1x4xf32> to vector<8x4xf32>
    %22 = arith.addf %20, %21 : vector<8x4xf32>
    %23 = vector.broadcast %9 : vector<1x4xf32> to vector<8x4xf32>
    %24 = arith.mulf %23, %1 : vector<8x4xf32>
    %25 = arith.addf %22, %24 : vector<8x4xf32>
    %cst_17 = arith.constant -5.000000e-01 : f32
    %26 = vector.broadcast %cst_17 : f32 to vector<8x4xf32>
    %27 = arith.mulf %26, %1 : vector<8x4xf32>
    %28 = arith.mulf %27, %1 : vector<8x4xf32>
    %29 = vector.broadcast %11 : vector<1x4xf32> to vector<8x4xf32>
    %30 = arith.subf %28, %29 : vector<8x4xf32>
    %cst_18 = arith.constant dense<0.000000e+00> : vector<8xf32>
    %31 = vector.multi_reduction <add>, %30, %cst_18 [1] : vector<8x4xf32> to vector<8xf32>
    %32 = vector.shape_cast %31 : vector<8xf32> to vector<8x1xf32>
    %33 = arith.subf %2, %22 : vector<8x4xf32>
    %34 = arith.mulf %33, %33 : vector<8x4xf32>
    %cst_19 = arith.constant 0.000000e+00 : f32
    %35 = vector.broadcast %cst_19 : f32 to vector<8x4xf32>
    %36 = arith.subf %35, %34 : vector<8x4xf32>
    %37 = vector.broadcast %10 : vector<1x4xf32> to vector<8x4xf32>
    %38 = arith.mulf %36, %37 : vector<8x4xf32>
    %39 = vector.broadcast %11 : vector<1x4xf32> to vector<8x4xf32>
    %40 = arith.subf %38, %39 : vector<8x4xf32>
    %cst_20 = arith.constant dense<0.000000e+00> : vector<8xf32>
    %41 = vector.multi_reduction <add>, %40, %cst_20 [1] : vector<8x4xf32> to vector<8xf32>
    %42 = vector.shape_cast %41 : vector<8xf32> to vector<8x1xf32>
    %c0_21 = arith.constant 0 : index
    %c0_22 = arith.constant 0 : index
    %43 = vector.load %arg5[%c0_21, %c0_22] : memref<8x6xf32, #tpu.memory_space<vmem>>, vector<8x4xf32>
    tpu.vector_store %arg5[%c0_21, %c0_22], %25 {strides = array<i32>} : memref<8x6xf32, #tpu.memory_space<vmem>>, vector<8x4xf32>,
    %c0_23 = arith.constant 0 : index
    %c4 = arith.constant 4 : index
    %44 = vector.load %arg5[%c0_23, %c4] : memref<8x6xf32, #tpu.memory_space<vmem>>, vector<8x1xf32>
    tpu.vector_store %arg5[%c0_23, %c4], %42 {strides = array<i32>} : memref<8x6xf32, #tpu.memory_space<vmem>>, vector<8x1xf32>,
    %c0_24 = arith.constant 0 : index
    %c5 = arith.constant 5 : index
    %45 = vector.load %arg5[%c0_24, %c5] : memref<8x6xf32, #tpu.memory_space<vmem>>, vector<8x1xf32>
    tpu.vector_store %arg5[%c0_24, %c5], %32 {strides = array<i32>} : memref<8x6xf32, #tpu.memory_space<vmem>>, vector<8x1xf32>,
    return
  }
  func.func @transform_0(%arg0: i32) -> (i32, i32) {
    %c0_i32 = arith.constant 0 : i32
    %c0_i32_0 = arith.constant 0 : i32
    return %arg0, %c0_i32 : i32, i32
  }
  func.func @transform_1(%arg0: i32) -> (i32, i32) {
    %c0_i32 = arith.constant 0 : i32
    %c0_i32_0 = arith.constant 0 : i32
    return %arg0, %c0_i32 : i32, i32
  }
  func.func @transform_2(%arg0: i32) -> (i32, i32) {
    %c0_i32 = arith.constant 0 : i32
    %c0_i32_0 = arith.constant 0 : i32
    return %arg0, %c0_i32 : i32, i32
  }
  func.func @transform_3(%arg0: i32) -> (i32, i32) {
    %c0_i32 = arith.constant 0 : i32
    %c0_i32_0 = arith.constant 0 : i32
    %c0_i32_1 = arith.constant 0 : i32
    return %c0_i32, %c0_i32_0 : i32, i32
  }
  func.func @transform_4(%arg0: i32) -> (i32, i32) {
    %c0_i32 = arith.constant 0 : i32
    %c0_i32_0 = arith.constant 0 : i32
    return %arg0, %c0_i32 : i32, i32
  }
}

</mosaic_0001>

<llo_original>
// kernel: tpu_custom_call.1
$region0: #{tpu_custom_call.1}
  #allocation0 [shape = 'u32[]', space=smem, size = 0x4, offset = 0x4, fixed_abs, tag = 'smem constant byte address 0x4 - core index']
  #allocation1 [shape = 'u32[72,128]{1,0:T(1,128)}', space=vmem, size = 0x9000, scoped, tag = 'internal scratch']
  %s0 = inlined_call_operand.vmem [shape: f32[8,16], index: 0, kind: input, shape index: {}]
  %s1 = inlined_call_operand.vmem [shape: f32[8,4], index: 1, kind: input, shape index: {}]
  %s2 = inlined_call_operand.vmem [shape: f32[8,4], index: 2, kind: input, shape index: {}]
  %s3 = inlined_call_operand.vmem [shape: f32[128,32], index: 3, kind: input, shape index: {}]
  %s4 = inlined_call_operand.hbm [shape: f32[8,6], index: 4, kind: output, shape index: {}]
  %s5 = sld [smem:[#allocation0]]
  $region26: #{tpu_custom_call.1} parent=0
    _
  %s7 = ssub.s32 1, %s5
  %s8 = scalar_select 0, %s7, %s5
  $region1: #{tpu_custom_call.1} parent=0
    #allocation2 [shape = 'u8[4096]{0}', space=vmem, size = 0x1000, scoped, tag = 'output window, operand 0, single buffered']
    #allocation3 [shape = 's32[1]{0}', space=sflag, size = 0x4, scoped, tag = 'scoped memory for tpu_custom_call.1']
    %9 = vsyncpa [#allocation3], 0
    // Predicated region
    $region2: #{tpu_custom_call.1} parent=1 // pred_check
      _
    $region3: #{tpu_custom_call.1} parent=1 // pred_check_branch
      %11 = sbr.rel (0) target = $region5
    $region4: #{tpu_custom_call.1} parent=1 // pred_region
      _
    $region5: #{tpu_custom_call.1} parent=1 // pred_fallthru
      _
    // Predicated region
    $region6: #{tpu_custom_call.1} parent=1 // pred_check
      _
    $region7: #{tpu_custom_call.1} parent=1 // pred_check_branch
      %13 = sbr.rel (0) target = $region9
    $region8: #{tpu_custom_call.1} parent=1 // pred_region
      _
    $region9: #{tpu_custom_call.1} parent=1 // pred_fallthru
      _
    // Predicated region
    $region10: #{tpu_custom_call.1} parent=1 // pred_check
      _
    $region11: #{tpu_custom_call.1} parent=1 // pred_check_branch
      %15 = sbr.rel (0) target = $region13
    $region12: #{tpu_custom_call.1} parent=1 // pred_region
      _
    $region13: #{tpu_custom_call.1} parent=1 // pred_fallthru
      _
    // Predicated region
    $region14: #{tpu_custom_call.1} parent=1 // pred_check
      _
    $region15: #{tpu_custom_call.1} parent=1 // pred_check_branch
      %17 = sbr.rel (0) target = $region17
    $region16: #{tpu_custom_call.1} parent=1 // pred_region
      _
    $region17: #{tpu_custom_call.1} parent=1 // pred_fallthru
      _
    %v18 = vld [vmem:[%s0] sm:$0xff]
    %v19 = vld [vmem:[%s1] sm:$0xff]
    %v20 = vld [vmem:[%s2] sm:$0xff]
    %v21 = vld [vmem:[%s3] sm:$0xff]
    %v22 = vld [vmem:[%s3 + $0x8] sm:$0xff]
    %v23 = vld [vmem:[%s3 + $0x10] sm:$0x1]
    %v24 = vld [vmem:[%s3 + $0x18] sm:$0xff]
    %v25 = vld [vmem:[%s3 + $0x20] sm:$0xff]
    %v26 = vld [vmem:[%s3 + $0x28] sm:$0xff]
    %v27 = vld [vmem:[%s3 + $0x30] sm:$0xff]
    %v28 = vld [vmem:[%s3 + $0x38] sm:$0x1]
    %v29 = vld [vmem:[%s3 + $0x40] sm:$0xff]
    %v30 = vld [vmem:[%s3 + $0x48] sm:$0xff]
    %v31 = vld [vmem:[%s3 + $0x50] sm:$0xff]
    %v32 = vld [vmem:[%s3 + $0x58] sm:$0xff]
    %v33 = vld [vmem:[%s3 + $0x60] sm:$0x1]
    %v34 = vld [vmem:[%s3 + $0x68] sm:$0x1]
    %v35 = vld [vmem:[%s3 + $0x70] sm:$0x1]
    %v36 = vld [vmem:[%s3 + $0x78] sm:$0x1]
    %v37 = vperm.slane %v23, 0
    %vm38 = vcmask 130048
    %v40 = vsel %vm38, %v18, 0
    %42 = vmatpush.msra.mxu0 0.0
    %43 = vmatpush.msra.mxu0 0.0
    %44 = vmatpush.msra.mxu0 0.0
    %45 = vmatpush.msra.mxu0 0.0
    %46 = vmatpush.msra.mxu0 0.0
    %47 = vmatpush.msra.mxu0 0.0
    %48 = vmatpush.msra.mxu0 0.0
    %49 = vmatpush.msra.mxu0 0.0
    %50 = vmatpush.msra.mxu0 0.0
    %51 = vmatpush.msra.mxu0 0.0
    %52 = vmatpush.msra.mxu0 0.0
    %53 = vmatpush.msra.mxu0 0.0
    %54 = vmatpush.msra.mxu0 0.0
    %55 = vmatpush.msra.mxu0 0.0
    %56 = vmatpush.msra.mxu0 %v22
    %57 = vmatpush.msra.mxu0 %v21
    %58 = vmatmul.f32.gmra.mxu0 %v40
    %v59 = vpop.f32.mrf.mxu0
    %v60 = vadd.f32 %v37, %v59
    %61 = vdwg.mxu0
    %v62 = vtanh.pop %v60
    %v63 = vperm.slane %v28, 0
    %vm64 = vcmask 261120
    %v66 = vsel %vm64, %v62, 0
    %68 = vmatpush.msra.mxu0 0.0
    %69 = vmatpush.msra.mxu0 0.0
    %70 = vmatpush.msra.mxu0 0.0
    %71 = vmatpush.msra.mxu0 0.0
    %72 = vmatpush.msra.mxu0 0.0
    %73 = vmatpush.msra.mxu0 0.0
    %74 = vmatpush.msra.mxu0 0.0
    %75 = vmatpush.msra.mxu0 0.0
    %76 = vmatpush.msra.mxu0 0.0
    %77 = vmatpush.msra.mxu0 0.0
    %78 = vmatpush.msra.mxu0 0.0
    %79 = vmatpush.msra.mxu0 0.0
    %80 = vmatpush.msra.mxu0 %v27
    %81 = vmatpush.msra.mxu0 %v26
    %82 = vmatpush.msra.mxu0 %v25
    %83 = vmatpush.msra.mxu0 %v24
    %84 = vmatmul.f32.gmra.mxu0 %v66
    %v85 = vpop.f32.mrf.mxu0
    %v86 = vadd.f32 %v63, %v85
    %87 = vdwg.mxu0
    %v88 = vtanh.pop %v86
    %v89 = vperm.slane %v33, 0
    %v91 = vsel %vm64, %v88, 0
    %93 = vmatpush.msra.mxu0 0.0
    %94 = vmatpush.msra.mxu0 0.0
    %95 = vmatpush.msra.mxu0 0.0
    %96 = vmatpush.msra.mxu0 0.0
    %97 = vmatpush.msra.mxu0 0.0
    %98 = vmatpush.msra.mxu0 0.0
    %99 = vmatpush.msra.mxu0 0.0
    %100 = vmatpush.msra.mxu0 0.0
    %101 = vmatpush.msra.mxu0 0.0
    %102 = vmatpush.msra.mxu0 0.0
    %103 = vmatpush.msra.mxu0 0.0
    %104 = vmatpush.msra.mxu0 0.0
    %105 = vmatpush.msra.mxu0 %v32
    %106 = vmatpush.msra.mxu0 %v31
    %107 = vmatpush.msra.mxu0 %v30
    %108 = vmatpush.msra.mxu0 %v29
    %109 = vmatmul.f32.gmra.mxu0 %v91
    %v110 = vpop.f32.mrf.mxu0
    %v111 = vadd.f32 %v89, %v110
    %112 = vdwg.mxu0
    %v113 = vperm.slane %v34, 0
    %v114 = vmul.f32 %v113, %v19
    %v115 = vadd.f32 %v111, %v114
    %v116 = vmul.f32 %v19, -0.5
    %v117 = vmul.f32 %v116, %v19
    %v118 = vperm.slane %v36, 0
    %v119 = vsub.f32 %v117, %v118
    %vm120 = vcmask 31744
    %v121 = vsel %vm120, %v119, 0.0
    %122 = vadd.xlane.f32.xlu0 %v121
    %v123 = vpop.xlane.xlu0 %122
    %v124 = vsub.f32 %v20, %v111
    %v125 = vmul.f32 %v124, %v124
    %v126 = vsub.f32 0.0, %v125
    %v127 = vperm.slane %v35, 0
    %v128 = vmul.f32 %v126, %v127
    %v129 = vsub.f32 %v128, %v118
    %v130 = vsel %vm120, %v129, 0.0
    %131 = vadd.xlane.f32.xlu0 %v130
    %v132 = vpop.xlane.xlu0 %131
    %133 = vst.msk [vmem:[#allocation2] sm:$0xff] %vm120, %v115
    %vm134 = vcmask 39968
    %135 = vst.msk [vmem:[#allocation2] sm:$0xff] %vm134, %v132
    %vm136 = vcmask 48168
    %137 = vst.msk [vmem:[#allocation2] sm:$0xff] %vm136, %v123
    // Predicated region
    $region18: #{tpu_custom_call.1} parent=1 // pred_check
      _
    $region19: #{tpu_custom_call.1} parent=1 // pred_check_branch
      %139 = sbr.rel (0) target = $region21
    $region20: #{tpu_custom_call.1} parent=1 // pred_region
      %141 = vsyncadd [#allocation3], 0
      %s143 = sshll.u32 [#allocation2], 4
      %s144 = int_to_ptr.vmem [resolvable:$true] %s143
      %s145 = sshll.u32 %s4, 4
      %s146 = int_to_ptr.hbm [resolvable:$true] %s145
      %148 = dma.vmem_to_hbm [thread:$0]  %s144, 128, %s146, [#allocation3]
    $region21: #{tpu_custom_call.1} parent=1 // pred_fallthru
      _
    // Predicated region
    $region22: #{tpu_custom_call.1} parent=1 // pred_check
      _
    $region23: #{tpu_custom_call.1} parent=1 // pred_check_branch
      %150 = sbr.rel (0) target = $region25
    $region24: #{tpu_custom_call.1} parent=1 // pred_region
      %152 = dma.done [#allocation3], 128
    $region25: #{tpu_custom_call.1} parent=1 // pred_fallthru
      _
    %153 = vsyncpa [#allocation3], 1

</llo_original>
